<compile_context>
chip_gen: v5e
topology: v5e:2x2
jax: 0.10.0
libtpu: 0.0.40
codegen_flags: <defaults>
</compile_context>

<pallas_src>
import functools

import jax
import jax.numpy as jnp
from jax.experimental import pallas as pl
from jax.experimental.pallas import tpu as pltpu

F_IN, HID, F_OUT = 50, 250, 50     # logical (PyTorch) feature sizes
HID_P, F_OUT_P = 256, 128          # lane-dense padded sizes (hidden / output)


def _round_up(n, m):
    return ((n + m - 1) // m) * m


def _pad_to(a, shape):
    return jnp.pad(a, [(0, s - d) for d, s in zip(a.shape, shape)])


def prepare_params(params):
    """One-time padding/casting of the parameters (hoisted out of the per-call path).

    Zero padding is exact: padded rows/cols are zero, so valid outputs are
    unchanged and the padded output columns are sliced off by the wrapper.
    """
    w1, b1, w2, b2, w3, b3 = params
    w1p = _pad_to(w1, (F_IN, HID_P)).astype(jnp.bfloat16)      # (50, 256): K stays 50
    w2p = _pad_to(w2, (HID_P, HID_P)).astype(jnp.bfloat16)     # (256, 256)
    w3p = _pad_to(w3, (HID_P, F_OUT_P)).astype(jnp.bfloat16)   # (256, 128)
    b1p = _pad_to(b1, (1, HID_P)).astype(jnp.bfloat16)         # bf16 epilogue bias
    b2p = _pad_to(b2, (1, HID_P)).astype(jnp.bfloat16)
    b3p = _pad_to(b3, (1, F_OUT_P)).astype(jnp.float32)        # final layer kept f32
    return (w1p, b1p, w2p, b2p, w3p, b3p)


def _mlp_kernel(x_ref, w1_ref, b1_ref, w2_ref, b2_ref, w3_ref, b3_ref, o_ref):
    # x tile arrives as (TB, 50) f32; cast to bf16 in-kernel (cheap VPU work,
    # saves a whole host-side pad+cast pass over the batch in HBM).
    x = x_ref[...].astype(jnp.bfloat16)

    # Layer 1: K=50 contraction (Mosaic pads it internally), f32 accumulation,
    # then bf16 bias-add + ReLU fused with the pre-cast for the next matmul.
    acc1 = jnp.dot(x, w1_ref[...], preferred_element_type=jnp.float32)
    h1 = jnp.maximum(acc1.astype(jnp.bfloat16) + b1_ref[...], 0)

    acc2 = jnp.dot(h1, w2_ref[...], preferred_element_type=jnp.float32)
    h2 = jnp.maximum(acc2.astype(jnp.bfloat16) + b2_ref[...], 0)

    # Final layer stays f32 for the bias add and the sigmoid.
    z = jnp.dot(h2, w3_ref[...], preferred_element_type=jnp.float32) + b3_ref[...]
    # sigmoid(z) = 0.5 * (tanh(z/2) + 1): single EUP push, overflow-safe.
    o_ref[...] = (0.5 * (jnp.tanh(0.5 * z) + 1.0)).astype(o_ref.dtype)


@functools.partial(jax.jit, static_argnames=("batch_tile",))
def find_correct_piece_forward(x, prepared_params, *, batch_tile=2048):
    """x: (B, 50) float32 -> (B, 50) float32 (sigmoid outputs)."""
    w1p, b1p, w2p, b2p, w3p, b3p = prepared_params
    B = x.shape[0]

    # Batch tile: large to amortize per-step overhead, multiple of 16 (bf16
    # sublane packing), capped so n_tiles >= 2 whenever possible (dual-TC on
    # v7x).  At TB=2048 the per-step VMEM footprint is ~8-10 MiB, well inside
    # the default scoped VMEM on every generation.
    TB = min(batch_tile, max(16, _round_up(pl.cdiv(B, 2), 16)))
    Bp = _round_up(B, TB)
    n_tiles = Bp // TB

    # Only the batch axis is padded (zero rows, f32) -- no feature padding or
    # dtype cast over the batch on the host.
    if Bp != B:
        x = jnp.pad(x, ((0, Bp - B), (0, 0)))

    resident = lambda a: pl.BlockSpec(a.shape, lambda i: (0, 0))
    in_specs = [
        pl.BlockSpec((TB, F_IN), lambda i: (i, 0)),   # x tile, (TB, 50) f32
        resident(w1p), resident(b1p),
        resident(w2p), resident(b2p),
        resident(w3p), resident(b3p),
    ]
    out_specs = pl.BlockSpec((TB, F_OUT_P), lambda i: (i, 0))

    flops = 2 * Bp * (F_IN * HID_P + HID_P * HID_P + HID_P * F_OUT_P)
    bytes_accessed = (
        Bp * F_IN * 4                       # x (f32)
        + Bp * F_OUT_P * 2                  # out (bf16)
        + (w1p.size + w2p.size + w3p.size + b1p.size + b2p.size) * 2
        + b3p.size * 4
    )
    cost = pl.CostEstimate(flops=flops, transcendentals=Bp * F_OUT_P,
                           bytes_accessed=bytes_accessed)

    out_padded = pl.pallas_call(
        _mlp_kernel,
        out_shape=jax.ShapeDtypeStruct((Bp, F_OUT_P), jnp.bfloat16),
        grid_spec=pltpu.PrefetchScalarGridSpec(
            num_scalar_prefetch=0,
            grid=(n_tiles,),
            in_specs=in_specs,
            out_specs=out_specs,
        ),
        compiler_params=pltpu.CompilerParams(
            dimension_semantics=("parallel",)),
        cost_estimate=cost,
    )(x, w1p, b1p, w2p, b2p, w3p, b3p)

    # Slice off padding and upcast the bf16 store for the caller.
    return out_padded[:B, :F_OUT].astype(jnp.float32)


def init_params(key):
    """Deterministic init mimicking torch.nn.Linear default (U[-1/sqrt(fan_in), 1/sqrt(fan_in)])."""
    def linear(k, fan_in, fan_out):
        kw, kb = jax.random.split(k)
        bound = 1.0 / jnp.sqrt(fan_in)
        w = jax.random.uniform(kw, (fan_in, fan_out), jnp.float32, -bound, bound)
        b = jax.random.uniform(kb, (1, fan_out), jnp.float32, -bound, bound)
        return w, b

    k1, k2, k3 = jax.random.split(key, 3)
    w1, b1 = linear(k1, F_IN, HID)
    w2, b2 = linear(k2, HID, HID)
    w3, b3 = linear(k3, HID, F_OUT)
    return (w1, b1, w2, b2, w3, b3)


def reference_forward(x, params):
    w1, b1, w2, b2, w3, b3 = params
    h1 = jnp.maximum(x @ w1 + b1, 0.0)
    h2 = jnp.maximum(h1 @ w2 + b2, 0.0)
    return jax.nn.sigmoid(h2 @ w3 + b3)


# TODO(synk): criterion_l1_loss / criterion_mse_loss are training-time loss
# helpers, not part of the forward pass; they are not implemented as kernels.

if __name__ == "__main__":
    key = jax.random.PRNGKey(0)
    kx, kp, kx2 = jax.random.split(key, 3)
    params = init_params(kp)
    prepared = prepare_params(params)   # pad/cast parameters once

    # Small batch (single grid step, batch padded 8 -> 16 rows).
    B = 8
    x = jax.random.normal(kx, (B, F_IN), jnp.float32)
    out = jax.block_until_ready(find_correct_piece_forward(x, prepared))
    ref = reference_forward(x, params)
    assert out.shape == (B, F_OUT), out.shape
    # bf16 matmul operands/epilogue + bf16 output store -> relaxed tolerance.
    assert jnp.allclose(out, ref, atol=2.5e-2, rtol=2.5e-2), "mismatch vs reference (B=8)"

    # Larger batch exercising the 2-tile batch grid + row padding/slicing.
    B2 = 260
    x2 = jax.random.normal(kx2, (B2, F_IN), jnp.float32)
    out2 = jax.block_until_ready(find_correct_piece_forward(x2, prepared))
    ref2 = reference_forward(x2, params)
    assert out2.shape == (B2, F_OUT), out2.shape
    assert jnp.allclose(out2, ref2, atol=2.5e-2, rtol=2.5e-2), "mismatch vs reference (B=260)"

    print("KERNEL_OK")
</pallas_src>

<mosaic_0001>
module attributes {stable_mosaic.version = 11 : i64} {
  func.func @_mlp_kernel(%arg0: i32, %arg1: memref<16x50xf32, #tpu.memory_space<vmem>>, %arg2: memref<50x256xbf16, #tpu.memory_space<vmem>>, %arg3: memref<1x256xbf16, #tpu.memory_space<vmem>>, %arg4: memref<256x256xbf16, #tpu.memory_space<vmem>>, %arg5: memref<1x256xbf16, #tpu.memory_space<vmem>>, %arg6: memref<256x128xbf16, #tpu.memory_space<vmem>>, %arg7: memref<1x128xf32, #tpu.memory_space<vmem>>, %arg8: memref<16x128xbf16, #tpu.memory_space<vmem>>) attributes {dimension_semantics = [#tpu.dimension_semantics<parallel>], iteration_bounds = array<i64: 1>, scalar_prefetch = 0 : i64, scratch_operands = 0 : i64, tpu.core_type = #tpu.core_type<tc>, window_params = [{transform_indices = @transform_0, window_bounds = array<i64: 16, 50>}, {pipeline_mode = #tpu.pipeline_mode<synchronous>, transform_indices = @transform_1, window_bounds = array<i64: 50, 256>}, {pipeline_mode = #tpu.pipeline_mode<synchronous>, transform_indices = @transform_2, window_bounds = array<i64: 1, 256>}, {pipeline_mode = #tpu.pipeline_mode<synchronous>, transform_indices = @transform_3, window_bounds = array<i64: 256, 256>}, {pipeline_mode = #tpu.pipeline_mode<synchronous>, transform_indices = @transform_4, window_bounds = array<i64: 1, 256>}, {pipeline_mode = #tpu.pipeline_mode<synchronous>, transform_indices = @transform_5, window_bounds = array<i64: 256, 128>}, {pipeline_mode = #tpu.pipeline_mode<synchronous>, transform_indices = @transform_6, window_bounds = array<i64: 1, 128>}, {transform_indices = @transform_7, window_bounds = array<i64: 16, 128>}]} {
    %c0 = arith.constant 0 : index
    %c0_0 = arith.constant 0 : index
    %0 = vector.load %arg1[%c0, %c0_0] : memref<16x50xf32, #tpu.memory_space<vmem>>, vector<16x50xf32>
    %1 = arith.truncf %0 : vector<16x50xf32> to vector<16x50xbf16>
    %c0_1 = arith.constant 0 : index
    %c0_2 = arith.constant 0 : index
    %2 = vector.load %arg2[%c0_1, %c0_2] : memref<50x256xbf16, #tpu.memory_space<vmem>>, vector<50x256xbf16>
    %cst = arith.constant dense<0.000000e+00> : vector<16x256xf32>
    %3 = tpu.matmul %1, %2, %cst {dimension_numbers = #tpu.dot_dimension_numbers<[1], [0], [0], [1], [0, 0, 1, 1], [], []>} : vector<16x50xbf16>, vector<50x256xbf16>, vector<16x256xf32> -> vector<16x256xf32>
    %4 = arith.truncf %3 : vector<16x256xf32> to vector<16x256xbf16>
    %c0_3 = arith.constant 0 : index
    %c0_4 = arith.constant 0 : index
    %5 = vector.load %arg3[%c0_3, %c0_4] : memref<1x256xbf16, #tpu.memory_space<vmem>>, vector<1x256xbf16>
    %6 = vector.broadcast %5 : vector<1x256xbf16> to vector<16x256xbf16>
    %7 = arith.addf %4, %6 : vector<16x256xbf16>
    %cst_5 = arith.constant 0.000000e+00 : bf16
    %8 = vector.broadcast %cst_5 : bf16 to vector<16x256xbf16>
    %9 = arith.maximumf %7, %8 : vector<16x256xbf16>
    %c0_6 = arith.constant 0 : index
    %c0_7 = arith.constant 0 : index
    %10 = vector.load %arg4[%c0_6, %c0_7] : memref<256x256xbf16, #tpu.memory_space<vmem>>, vector<256x256xbf16>
    %cst_8 = arith.constant dense<0.000000e+00> : vector<16x256xf32>
    %11 = tpu.matmul %9, %10, %cst_8 {dimension_numbers = #tpu.dot_dimension_numbers<[1], [0], [0], [1], [0, 0, 1, 1], [], []>} : vector<16x256xbf16>, vector<256x256xbf16>, vector<16x256xf32> -> vector<16x256xf32>
    %12 = arith.truncf %11 : vector<16x256xf32> to vector<16x256xbf16>
    %c0_9 = arith.constant 0 : index
    %c0_10 = arith.constant 0 : index
    %13 = vector.load %arg5[%c0_9, %c0_10] : memref<1x256xbf16, #tpu.memory_space<vmem>>, vector<1x256xbf16>
    %14 = vector.broadcast %13 : vector<1x256xbf16> to vector<16x256xbf16>
    %15 = arith.addf %12, %14 : vector<16x256xbf16>
    %cst_11 = arith.constant 0.000000e+00 : bf16
    %16 = vector.broadcast %cst_11 : bf16 to vector<16x256xbf16>
    %17 = arith.maximumf %15, %16 : vector<16x256xbf16>
    %c0_12 = arith.constant 0 : index
    %c0_13 = arith.constant 0 : index
    %18 = vector.load %arg6[%c0_12, %c0_13] : memref<256x128xbf16, #tpu.memory_space<vmem>>, vector<256x128xbf16>
    %cst_14 = arith.constant dense<0.000000e+00> : vector<16x128xf32>
    %19 = tpu.matmul %17, %18, %cst_14 {dimension_numbers = #tpu.dot_dimension_numbers<[1], [0], [0], [1], [0, 0, 1, 1], [], []>} : vector<16x256xbf16>, vector<256x128xbf16>, vector<16x128xf32> -> vector<16x128xf32>
    %c0_15 = arith.constant 0 : index
    %c0_16 = arith.constant 0 : index
    %20 = vector.load %arg7[%c0_15, %c0_16] : memref<1x128xf32, #tpu.memory_space<vmem>>, vector<1x128xf32>
    %21 = vector.broadcast %20 : vector<1x128xf32> to vector<16x128xf32>
    %22 = arith.addf %19, %21 : vector<16x128xf32>
    %cst_17 = arith.constant 5.000000e-01 : f32
    %23 = vector.broadcast %cst_17 : f32 to vector<16x128xf32>
    %24 = arith.mulf %23, %22 : vector<16x128xf32>
    %25 = math.tanh %24 : vector<16x128xf32>
    %cst_18 = arith.constant 1.000000e+00 : f32
    %26 = vector.broadcast %cst_18 : f32 to vector<16x128xf32>
    %27 = arith.addf %25, %26 : vector<16x128xf32>
    %cst_19 = arith.constant 5.000000e-01 : f32
    %28 = vector.broadcast %cst_19 : f32 to vector<16x128xf32>
    %29 = arith.mulf %28, %27 : vector<16x128xf32>
    %30 = arith.truncf %29 : vector<16x128xf32> to vector<16x128xbf16>
    %c0_20 = arith.constant 0 : index
    %c0_21 = arith.constant 0 : index
    %31 = vector.load %arg8[%c0_20, %c0_21] : memref<16x128xbf16, #tpu.memory_space<vmem>>, vector<16x128xbf16>
    tpu.vector_store %arg8[%c0_20, %c0_21], %30 {strides = array<i32>} : memref<16x128xbf16, #tpu.memory_space<vmem>>, vector<16x128xbf16>,
    return
  }
  func.func @transform_0(%arg0: i32) -> (i32, i32) {
    %c0_i32 = arith.constant 0 : i32
    %c0_i32_0 = arith.constant 0 : i32
    return %arg0, %c0_i32 : i32, i32
  }
  func.func @transform_1(%arg0: i32) -> (i32, i32) {
    %c0_i32 = arith.constant 0 : i32
    %c0_i32_0 = arith.constant 0 : i32
    %c0_i32_1 = arith.constant 0 : i32
    return %c0_i32, %c0_i32_0 : i32, i32
  }
  func.func @transform_2(%arg0: i32) -> (i32, i32) {
    %c0_i32 = arith.constant 0 : i32
    %c0_i32_0 = arith.constant 0 : i32
    %c0_i32_1 = arith.constant 0 : i32
    return %c0_i32, %c0_i32_0 : i32, i32
  }
  func.func @transform_3(%arg0: i32) -> (i32, i32) {
    %c0_i32 = arith.constant 0 : i32
    %c0_i32_0 = arith.constant 0 : i32
    %c0_i32_1 = arith.constant 0 : i32
    return %c0_i32, %c0_i32_0 : i32, i32
  }
  func.func @transform_4(%arg0: i32) -> (i32, i32) {
    %c0_i32 = arith.constant 0 : i32
    %c0_i32_0 = arith.constant 0 : i32
    %c0_i32_1 = arith.constant 0 : i32
    return %c0_i32, %c0_i32_0 : i32, i32
  }
  func.func @transform_5(%arg0: i32) -> (i32, i32) {
    %c0_i32 = arith.constant 0 : i32
    %c0_i32_0 = arith.constant 0 : i32
    %c0_i32_1 = arith.constant 0 : i32
    return %c0_i32, %c0_i32_0 : i32, i32
  }
  func.func @transform_6(%arg0: i32) -> (i32, i32) {
    %c0_i32 = arith.constant 0 : i32
    %c0_i32_0 = arith.constant 0 : i32
    %c0_i32_1 = arith.constant 0 : i32
    return %c0_i32, %c0_i32_0 : i32, i32
  }
  func.func @transform_7(%arg0: i32) -> (i32, i32) {
    %c0_i32 = arith.constant 0 : i32
    %c0_i32_0 = arith.constant 0 : i32
    return %arg0, %c0_i32 : i32, i32
  }
}

</mosaic_0001>

<llo_original>
// kernel: find_correct_piece_forward.1
$region0: #{find_correct_piece_forward.1}
  #allocation0 [shape = 'u32[]', space=smem, size = 0x4, offset = 0x4, fixed_abs, tag = 'smem constant byte address 0x4 - core index']
  #allocation1 [shape = 'u32[72,128]{1,0:T(1,128)}', space=vmem, size = 0x9000, scoped, tag = 'internal scratch']
  %s0 = inlined_call_operand.vmem [shape: f32[16,50], index: 0, kind: input, shape index: {}]
  %s1 = inlined_call_operand.hbm [shape: bf16[50,256], index: 1, kind: input, shape index: {}]
  %s2 = inlined_call_operand.vmem [shape: bf16[1,256], index: 2, kind: input, shape index: {}]
  %s3 = inlined_call_operand.hbm [shape: bf16[256,256], index: 3, kind: input, shape index: {}]
  %s4 = inlined_call_operand.vmem [shape: bf16[1,256], index: 4, kind: input, shape index: {}]
  %s5 = inlined_call_operand.hbm [shape: bf16[256,128], index: 5, kind: input, shape index: {}]
  %s6 = inlined_call_operand.vmem [shape: f32[1,128], index: 6, kind: input, shape index: {}]
  %s7 = inlined_call_operand.vmem [shape: bf16[16,128], index: 7, kind: output, shape index: {}]
  %s8 = sld [smem:[#allocation0]]
  $region50: #{find_correct_piece_forward.1} parent=0
    _
  %s10 = ssub.s32 1, %s8
  %s11 = scalar_select 0, %s10, %s8
  $region1: #{find_correct_piece_forward.1} parent=0
    #allocation2 [shape = 'u8[28672]{0}', space=vmem, size = 0x7000, scoped, tag = 'input window, operand 1, single buffered']
    #allocation3 [shape = 's32[1]{0}', space=sflag, size = 0x4, scoped, tag = 'scoped memory for find_correct_piece_forward.1']
    #allocation4 [shape = 'u8[131072]{0}', space=vmem, size = 0x20000, scoped, tag = 'input window, operand 3, single buffered']
    #allocation5 [shape = 's32[1]{0}', space=sflag, size = 0x4, scoped, tag = 'scoped memory for find_correct_piece_forward.1']
    #allocation6 [shape = 'u8[65536]{0}', space=vmem, size = 0x10000, scoped, tag = 'input window, operand 5, single buffered']
    %12 = vsyncpa [#allocation3], 0
    %13 = vsyncpa [#allocation5], 0
    // Predicated region
    $region2: #{find_correct_piece_forward.1} parent=1 // pred_check
      _
    $region3: #{find_correct_piece_forward.1} parent=1 // pred_check_branch
      %15 = sbr.rel (0) target = $region5
    $region4: #{find_correct_piece_forward.1} parent=1 // pred_region
      _
    $region5: #{find_correct_piece_forward.1} parent=1 // pred_fallthru
      _
    // Predicated region
    $region6: #{find_correct_piece_forward.1} parent=1 // pred_check
      _
    $region7: #{find_correct_piece_forward.1} parent=1 // pred_check_branch
      %17 = sbr.rel (0) target = $region9
    $region8: #{find_correct_piece_forward.1} parent=1 // pred_region
      %19 = vsyncadd [#allocation3], 0
      %s20 = sshll.u32 %s1, 4
      %s21 = int_to_ptr.hbm [resolvable:$true] %s20
      %s22 = sshll.u32 [#allocation2], 4
      %s23 = int_to_ptr.vmem [resolvable:$true] %s22
      %28 = dma.hbm_to_vmem [thread:$0]  %s21, 896, %s23, [#allocation3], 128, 128, 8
    $region9: #{find_correct_piece_forward.1} parent=1 // pred_fallthru
      _
    // Predicated region
    $region10: #{find_correct_piece_forward.1} parent=1 // pred_check
      _
    $region11: #{find_correct_piece_forward.1} parent=1 // pred_check_branch
      %30 = sbr.rel (0) target = $region13
    $region12: #{find_correct_piece_forward.1} parent=1 // pred_region
      _
    $region13: #{find_correct_piece_forward.1} parent=1 // pred_fallthru
      _
    // Predicated region
    $region14: #{find_correct_piece_forward.1} parent=1 // pred_check
      _
    $region15: #{find_correct_piece_forward.1} parent=1 // pred_check_branch
      %32 = sbr.rel (0) target = $region17
    $region16: #{find_correct_piece_forward.1} parent=1 // pred_region
      %34 = vsyncadd [#allocation5], 0
      %s35 = sshll.u32 %s3, 4
      %s36 = int_to_ptr.hbm [resolvable:$true] %s35
      %s37 = sshll.u32 [#allocation4], 4
      %s38 = int_to_ptr.vmem [resolvable:$true] %s37
      %43 = dma.hbm_to_vmem [thread:$0]  %s36, 4096, %s38, [#allocation5], 128, 128, 8
    $region17: #{find_correct_piece_forward.1} parent=1 // pred_fallthru
      _
    // Predicated region
    $region18: #{find_correct_piece_forward.1} parent=1 // pred_check
      _
    $region19: #{find_correct_piece_forward.1} parent=1 // pred_check_branch
      %45 = sbr.rel (0) target = $region21
    $region20: #{find_correct_piece_forward.1} parent=1 // pred_region
      _
    $region21: #{find_correct_piece_forward.1} parent=1 // pred_fallthru
      _
    // Predicated region
    $region22: #{find_correct_piece_forward.1} parent=1 // pred_check
      _
    $region23: #{find_correct_piece_forward.1} parent=1 // pred_check_branch
      %47 = sbr.rel (0) target = $region25
    $region24: #{find_correct_piece_forward.1} parent=1 // pred_region
      %49 = vsyncadd [#allocation5], 0
      %s50 = sshll.u32 %s5, 4
      %s51 = int_to_ptr.hbm [resolvable:$true] %s50
      %s52 = sshll.u32 [#allocation6], 4
      %s53 = int_to_ptr.vmem [resolvable:$true] %s52
      %58 = dma.hbm_to_vmem [thread:$0]  %s51, 2048, %s53, [#allocation5], 64, 64, 4
    $region25: #{find_correct_piece_forward.1} parent=1 // pred_fallthru
      _
    // Predicated region
    $region26: #{find_correct_piece_forward.1} parent=1 // pred_check
      _
    $region27: #{find_correct_piece_forward.1} parent=1 // pred_check_branch
      %60 = sbr.rel (0) target = $region29
    $region28: #{find_correct_piece_forward.1} parent=1 // pred_region
      _
    $region29: #{find_correct_piece_forward.1} parent=1 // pred_fallthru
      _
    // Predicated region
    $region30: #{find_correct_piece_forward.1} parent=1 // pred_check
      _
    $region31: #{find_correct_piece_forward.1} parent=1 // pred_check_branch
      %62 = sbr.rel (0) target = $region33
    $region32: #{find_correct_piece_forward.1} parent=1 // pred_region
      %64 = dma.done [#allocation3], 896
    $region33: #{find_correct_piece_forward.1} parent=1 // pred_fallthru
      _
    // Predicated region
    $region34: #{find_correct_piece_forward.1} parent=1 // pred_check
      _
    $region35: #{find_correct_piece_forward.1} parent=1 // pred_check_branch
      %66 = sbr.rel (0) target = $region37
    $region36: #{find_correct_piece_forward.1} parent=1 // pred_region
      %68 = dma.done [#allocation5], 4096
    $region37: #{find_correct_piece_forward.1} parent=1 // pred_fallthru
      _
    // Predicated region
    $region38: #{find_correct_piece_forward.1} parent=1 // pred_check
      _
    $region39: #{find_correct_piece_forward.1} parent=1 // pred_check_branch
      %70 = sbr.rel (0) target = $region41
    $region40: #{find_correct_piece_forward.1} parent=1 // pred_region
      %72 = dma.done [#allocation5], 2048
    $region41: #{find_correct_piece_forward.1} parent=1 // pred_fallthru
      _
    %v74 = vld [vmem:[%s0] sm:$0xff]
    %v75 = vld [vmem:[%s0 + $0x8] sm:$0xff]
    %v76 = vpack.c.bf16 %v75, %v74
    %v77 = vld [vmem:[#allocation2] sm:$0xff]
    %v78 = vld [vmem:[#allocation2 + $0x8] sm:$0xff]
    %v79 = vld [vmem:[#allocation2 + $0x10] sm:$0xff]
    %v80 = vld [vmem:[#allocation2 + $0x18] sm:$0xff]
    %v81 = vld [vmem:[#allocation2 + $0x20] sm:$0xff]
    %v82 = vld [vmem:[#allocation2 + $0x28] sm:$0xff]
    %v83 = vld [vmem:[#allocation2 + $0x30] sm:$0x11]
    %v91 = vunpack.c.l.b16 %v77
    %v92 = vunpack.c.h.b16 %v77
    %v93 = vunpack.c.l.b16 %v78
    %v94 = vunpack.c.h.b16 %v78
    %v95 = vunpack.c.l.b16 %v79
    %v96 = vunpack.c.h.b16 %v79
    %v97 = vunpack.c.l.b16 %v80
    %v98 = vunpack.c.h.b16 %v80
    %v99 = vunpack.c.l.b16 %v81
    %v100 = vunpack.c.h.b16 %v81
    %v101 = vunpack.c.l.b16 %v82
    %v102 = vunpack.c.h.b16 %v82
    %v103 = vunpack.c.l.b16 %v83
    %v104 = vunpack.c.h.b16 %v83
    %v105 = vpack.c.b16 %v93, %v91
    %v106 = vpack.c.b16 %v94, %v92
    %v107 = vpack.c.b16 %v97, %v95
    %v108 = vpack.c.b16 %v98, %v96
    %v109 = vpack.c.b16 %v101, %v99
    %v110 = vpack.c.b16 %v102, %v100
    %v111 = vpack.c.b16 %v103, %v103
    %v112 = vpack.c.b16 %v104, %v104
    %vm119 = vcmask 408576
    %v121 = vsel %vm119, %v76, 0
    %vm123 = vcmask 1040384
    %v125 = vsel %vm123, %v111, 0
    %v128 = vsel %vm123, %v112, 0
    %130 = vmatpush.bf16.msra.mxu0 0
    %131 = vmatpush.bf16.msra.mxu0 0
    %132 = vmatpush.bf16.msra.mxu0 0
    %133 = vmatpush.bf16.msra.mxu0 0
    %134 = vmatpush.bf16.msra.mxu0 %v125
    %135 = vmatpush.bf16.msra.mxu0 %v109
    %136 = vmatpush.bf16.msra.mxu0 %v107
    %137 = vmatpush.bf16.msra.mxu0 %v105
    %138 = vmatmul.bf16.gmra.mxu0 %v121
    %v139 = vpop.f32.mrf.mxu0
    %v140 = vadd.f32 0.0, %v139
    %v141 = vpop.f32.mrf.mxu0
    %v142 = vadd.f32 0.0, %v141
    %143 = vdwg.mxu0
    %144 = vmatpush.bf16.msra.mxu0 0
    %145 = vmatpush.bf16.msra.mxu0 0
    %146 = vmatpush.bf16.msra.mxu0 0
    %147 = vmatpush.bf16.msra.mxu0 0
    %148 = vmatpush.bf16.msra.mxu0 %v128
    %149 = vmatpush.bf16.msra.mxu0 %v110
    %150 = vmatpush.bf16.msra.mxu0 %v108
    %151 = vmatpush.bf16.msra.mxu0 %v106
    %152 = vmatmul.bf16.gmra.mxu0 %v121
    %v153 = vpop.f32.mrf.mxu0
    %v154 = vadd.f32 0.0, %v153
    %v155 = vpop.f32.mrf.mxu0
    %v156 = vadd.f32 0.0, %v155
    %157 = vdwg.mxu0
    %v158 = vpack.c.bf16 %v154, %v140
    %v159 = vpack.c.bf16 %v156, %v142
    %v160 = vld [vmem:[%s2] sm:$0x3]
    %162 = vst [vmem:[#allocation1] ss:$9 sm:$0xff] %v160
    %v163 = vld [vmem:[#allocation1] sm:$0xff]
    %v164 = vld [vmem:[#allocation1 + $0x9] sm:$0xff]
    %v165 = vpack.i.b16 %v163, %v163
    %v167 = vperm.slane %v165, 0
    %v168 = vpack.i.b16 %v164, %v164
    %v170 = vperm.slane %v168, 0
    %v171 = vunpack.c.l.bf16 %v158
    %v172 = vunpack.c.h.bf16 %v158
    %v173 = vunpack.c.l.bf16 %v159
    %v174 = vunpack.c.h.bf16 %v159
    %v175 = vunpack.c.l.bf16 %v167
    %v176 = vunpack.c.l.bf16 %v170
    %v177 = vadd.f32 %v171, %v175
    %v178 = vadd.f32 %v172, %v176
    %v179 = vadd.f32 %v173, %v175
    %v180 = vadd.f32 %v174, %v176
    %v181 = vpack.c.bf16 %v178, %v177
    %v182 = vpack.c.bf16 %v180, %v179
    %v183 = vunpack.c.l.bf16 %v181
    %v184 = vunpack.c.h.bf16 %v181
    %v185 = vunpack.c.l.bf16 %v182
    %v186 = vunpack.c.h.bf16 %v182
    %v187 = vmax.f32 %v183, 0.0
    %v188 = vmax.f32 %v184, 0.0
    %v189 = vmax.f32 %v185, 0.0
    %v190 = vmax.f32 %v186, 0.0
    %v191 = vpack.c.bf16 %v189, %v187
    %v192 = vpack.c.bf16 %v190, %v188
    %v193 = vld [vmem:[#allocation4] sm:$0xff]
    %v194 = vld [vmem:[#allocation4 + $0x8] sm:$0xff]
    %v195 = vld [vmem:[#allocation4 + $0x10] sm:$0xff]
    %v196 = vld [vmem:[#allocation4 + $0x18] sm:$0xff]
    %v197 = vld [vmem:[#allocation4 + $0x20] sm:$0xff]
    %v198 = vld [vmem:[#allocation4 + $0x28] sm:$0xff]
    %v199 = vld [vmem:[#allocation4 + $0x30] sm:$0xff]
    %v200 = vld [vmem:[#allocation4 + $0x38] sm:$0xff]
    %v201 = vld [vmem:[#allocation4 + $0x40] sm:$0xff]
    %v202 = vld [vmem:[#allocation4 + $0x48] sm:$0xff]
    %v203 = vld [vmem:[#allocation4 + $0x50] sm:$0xff]
    %v204 = vld [vmem:[#allocation4 + $0x58] sm:$0xff]
    %v205 = vld [vmem:[#allocation4 + $0x60] sm:$0xff]
    %v206 = vld [vmem:[#allocation4 + $0x68] sm:$0xff]
    %v207 = vld [vmem:[#allocation4 + $0x70] sm:$0xff]
    %v208 = vld [vmem:[#allocation4 + $0x78] sm:$0xff]
    %v209 = vld [vmem:[#allocation4 + $0x80] sm:$0xff]
    %v210 = vld [vmem:[#allocation4 + $0x88] sm:$0xff]
    %v211 = vld [vmem:[#allocation4 + $0x90] sm:$0xff]
    %v212 = vld [vmem:[#allocation4 + $0x98] sm:$0xff]
    %v213 = vld [vmem:[#allocation4 + $0xa0] sm:$0xff]
    %v214 = vld [vmem:[#allocation4 + $0xa8] sm:$0xff]
    %v215 = vld [vmem:[#allocation4 + $0xb0] sm:$0xff]
    %v216 = vld [vmem:[#allocation4 + $0xb8] sm:$0xff]
    %v217 = vld [vmem:[#allocation4 + $0xc0] sm:$0xff]
    %v218 = vld [vmem:[#allocation4 + $0xc8] sm:$0xff]
    %v219 = vld [vmem:[#allocation4 + $0xd0] sm:$0xff]
    %v220 = vld [vmem:[#allocation4 + $0xd8] sm:$0xff]
    %v221 = vld [vmem:[#allocation4 + $0xe0] sm:$0xff]
    %v222 = vld [vmem:[#allocation4 + $0xe8] sm:$0xff]
    %v223 = vld [vmem:[#allocation4 + $0xf0] sm:$0xff]
    %v224 = vld [vmem:[#allocation4 + $0xf8] sm:$0xff]
    %v257 = vunpack.c.l.b16 %v193
    %v258 = vunpack.c.h.b16 %v193
    %v259 = vunpack.c.l.b16 %v194
    %v260 = vunpack.c.h.b16 %v194
    %v261 = vunpack.c.l.b16 %v195
    %v262 = vunpack.c.h.b16 %v195
    %v263 = vunpack.c.l.b16 %v196
    %v264 = vunpack.c.h.b16 %v196
    %v265 = vunpack.c.l.b16 %v197
    %v266 = vunpack.c.h.b16 %v197
    %v267 = vunpack.c.l.b16 %v198
    %v268 = vunpack.c.h.b16 %v198
    %v269 = vunpack.c.l.b16 %v199
    %v270 = vunpack.c.h.b16 %v199
    %v271 = vunpack.c.l.b16 %v200
    %v272 = vunpack.c.h.b16 %v200
    %v273 = vunpack.c.l.b16 %v201
    %v274 = vunpack.c.h.b16 %v201
    %v275 = vunpack.c.l.b16 %v202
    %v276 = vunpack.c.h.b16 %v202
    %v277 = vunpack.c.l.b16 %v203
    %v278 = vunpack.c.h.b16 %v203
    %v279 = vunpack.c.l.b16 %v204
    %v280 = vunpack.c.h.b16 %v204
    %v281 = vunpack.c.l.b16 %v205
    %v282 = vunpack.c.h.b16 %v205
    %v283 = vunpack.c.l.b16 %v206
    %v284 = vunpack.c.h.b16 %v206
    %v285 = vunpack.c.l.b16 %v207
    %v286 = vunpack.c.h.b16 %v207
    %v287 = vunpack.c.l.b16 %v208
    %v288 = vunpack.c.h.b16 %v208
    %v289 = vunpack.c.l.b16 %v209
    %v290 = vunpack.c.h.b16 %v209
    %v291 = vunpack.c.l.b16 %v210
    %v292 = vunpack.c.h.b16 %v210
    %v293 = vunpack.c.l.b16 %v211
    %v294 = vunpack.c.h.b16 %v211
    %v295 = vunpack.c.l.b16 %v212
    %v296 = vunpack.c.h.b16 %v212
    %v297 = vunpack.c.l.b16 %v213
    %v298 = vunpack.c.h.b16 %v213
    %v299 = vunpack.c.l.b16 %v214
    %v300 = vunpack.c.h.b16 %v214
    %v301 = vunpack.c.l.b16 %v215
    %v302 = vunpack.c.h.b16 %v215
    %v303 = vunpack.c.l.b16 %v216
    %v304 = vunpack.c.h.b16 %v216
    %v305 = vunpack.c.l.b16 %v217
    %v306 = vunpack.c.h.b16 %v217
    %v307 = vunpack.c.l.b16 %v218
    %v308 = vunpack.c.h.b16 %v218
    %v309 = vunpack.c.l.b16 %v219
    %v310 = vunpack.c.h.b16 %v219
    %v311 = vunpack.c.l.b16 %v220
    %v312 = vunpack.c.h.b16 %v220
    %v313 = vunpack.c.l.b16 %v221
    %v314 = vunpack.c.h.b16 %v221
    %v315 = vunpack.c.l.b16 %v222
    %v316 = vunpack.c.h.b16 %v222
    %v317 = vunpack.c.l.b16 %v223
    %v318 = vunpack.c.h.b16 %v223
    %v319 = vunpack.c.l.b16 %v224
    %v320 = vunpack.c.h.b16 %v224
    %v321 = vpack.c.b16 %v259, %v257
    %v322 = vpack.c.b16 %v260, %v258
    %v323 = vpack.c.b16 %v263, %v261
    %v324 = vpack.c.b16 %v264, %v262
    %v325 = vpack.c.b16 %v267, %v265
    %v326 = vpack.c.b16 %v268, %v266
    %v327 = vpack.c.b16 %v271, %v269
    %v328 = vpack.c.b16 %v272, %v270
    %v329 = vpack.c.b16 %v275, %v273
    %v330 = vpack.c.b16 %v276, %v274
    %v331 = vpack.c.b16 %v279, %v277
    %v332 = vpack.c.b16 %v280, %v278
    %v333 = vpack.c.b16 %v283, %v281
    %v334 = vpack.c.b16 %v284, %v282
    %v335 = vpack.c.b16 %v287, %v285
    %v336 = vpack.c.b16 %v288, %v286
    %v337 = vpack.c.b16 %v291, %v289
    %v338 = vpack.c.b16 %v292, %v290
    %v339 = vpack.c.b16 %v295, %v293
    %v340 = vpack.c.b16 %v296, %v294
    %v341 = vpack.c.b16 %v299, %v297
    %v342 = vpack.c.b16 %v300, %v298
    %v343 = vpack.c.b16 %v303, %v301
    %v344 = vpack.c.b16 %v304, %v302
    %v345 = vpack.c.b16 %v307, %v305
    %v346 = vpack.c.b16 %v308, %v306
    %v347 = vpack.c.b16 %v311, %v309
    %v348 = vpack.c.b16 %v312, %v310
    %v349 = vpack.c.b16 %v315, %v313
    %v350 = vpack.c.b16 %v316, %v314
    %v351 = vpack.c.b16 %v319, %v317
    %v352 = vpack.c.b16 %v320, %v318
    %385 = vmatpush.bf16.msra.mxu0 %v335
    %386 = vmatpush.bf16.msra.mxu0 %v333
    %387 = vmatpush.bf16.msra.mxu0 %v331
    %388 = vmatpush.bf16.msra.mxu0 %v329
    %389 = vmatpush.bf16.msra.mxu0 %v327
    %390 = vmatpush.bf16.msra.mxu0 %v325
    %391 = vmatpush.bf16.msra.mxu0 %v323
    %392 = vmatpush.bf16.msra.mxu0 %v321
    %393 = vmatmul.bf16.gmra.mxu0 %v191
    %v394 = vpop.f32.mrf.mxu0
    %v395 = vadd.f32 0.0, %v394
    %v396 = vpop.f32.mrf.mxu0
    %v397 = vadd.f32 0.0, %v396
    %398 = vdwg.mxu0
    %399 = vmatpush.bf16.msra.mxu0 %v351
    %400 = vmatpush.bf16.msra.mxu0 %v349
    %401 = vmatpush.bf16.msra.mxu0 %v347
    %402 = vmatpush.bf16.msra.mxu0 %v345
    %403 = vmatpush.bf16.msra.mxu0 %v343
    %404 = vmatpush.bf16.msra.mxu0 %v341
    %405 = vmatpush.bf16.msra.mxu0 %v339
    %406 = vmatpush.bf16.msra.mxu0 %v337
    %407 = vmatmul.bf16.gmra.mxu0 %v192
    %v408 = vpop.f32.mrf.mxu0
    %v409 = vadd.f32 %v395, %v408
    %v410 = vpop.f32.mrf.mxu0
    %v411 = vadd.f32 %v397, %v410
    %412 = vdwg.mxu0
    %413 = vmatpush.bf16.msra.mxu0 %v336
    %414 = vmatpush.bf16.msra.mxu0 %v334
    %415 = vmatpush.bf16.msra.mxu0 %v332
    %416 = vmatpush.bf16.msra.mxu0 %v330
    %417 = vmatpush.bf16.msra.mxu0 %v328
    %418 = vmatpush.bf16.msra.mxu0 %v326
    %419 = vmatpush.bf16.msra.mxu0 %v324
    %420 = vmatpush.bf16.msra.mxu0 %v322
    %421 = vmatmul.bf16.gmra.mxu0 %v191
    %v422 = vpop.f32.mrf.mxu0
    %v423 = vadd.f32 0.0, %v422
    %v424 = vpop.f32.mrf.mxu0
    %v425 = vadd.f32 0.0, %v424
    %426 = vdwg.mxu0
    %427 = vmatpush.bf16.msra.mxu0 %v352
    %428 = vmatpush.bf16.msra.mxu0 %v350
    %429 = vmatpush.bf16.msra.mxu0 %v348
    %430 = vmatpush.bf16.msra.mxu0 %v346
    %431 = vmatpush.bf16.msra.mxu0 %v344
    %432 = vmatpush.bf16.msra.mxu0 %v342
    %433 = vmatpush.bf16.msra.mxu0 %v340
    %434 = vmatpush.bf16.msra.mxu0 %v338
    %435 = vmatmul.bf16.gmra.mxu0 %v192
    %v436 = vpop.f32.mrf.mxu0
    %v437 = vadd.f32 %v423, %v436
    %v438 = vpop.f32.mrf.mxu0
    %v439 = vadd.f32 %v425, %v438
    %440 = vdwg.mxu0
    %v441 = vpack.c.bf16 %v437, %v409
    %v442 = vpack.c.bf16 %v439, %v411
    %v443 = vld [vmem:[%s4] sm:$0x3]
    %445 = vst [vmem:[#allocation1] ss:$9 sm:$0xff] %v443
    %v446 = vld [vmem:[#allocation1] sm:$0xff]
    %v447 = vld [vmem:[#allocation1 + $0x9] sm:$0xff]
    %v448 = vpack.i.b16 %v446, %v446
    %v450 = vperm.slane %v448, 0
    %v451 = vpack.i.b16 %v447, %v447
    %v453 = vperm.slane %v451, 0
    %v454 = vunpack.c.l.bf16 %v441
    %v455 = vunpack.c.h.bf16 %v441
    %v456 = vunpack.c.l.bf16 %v442
    %v457 = vunpack.c.h.bf16 %v442
    %v458 = vunpack.c.l.bf16 %v450
    %v459 = vunpack.c.l.bf16 %v453
    %v460 = vadd.f32 %v454, %v458
    %v461 = vadd.f32 %v455, %v459
    %v462 = vadd.f32 %v456, %v458
    %v463 = vadd.f32 %v457, %v459
    %v464 = vpack.c.bf16 %v461, %v460
    %v465 = vpack.c.bf16 %v463, %v462
    %v466 = vunpack.c.l.bf16 %v464
    %v467 = vunpack.c.h.bf16 %v464
    %v468 = vunpack.c.l.bf16 %v465
    %v469 = vunpack.c.h.bf16 %v465
    %v470 = vmax.f32 %v466, 0.0
    %v471 = vmax.f32 %v467, 0.0
    %v472 = vmax.f32 %v468, 0.0
    %v473 = vmax.f32 %v469, 0.0
    %v474 = vpack.c.bf16 %v472, %v470
    %v475 = vpack.c.bf16 %v473, %v471
    %v476 = vld [vmem:[#allocation6] sm:$0xf]
    %v477 = vld [vmem:[#allocation6 + $0x4] sm:$0xf]
    %v478 = vld [vmem:[#allocation6 + $0x8] sm:$0xf]
    %v479 = vld [vmem:[#allocation6 + $0xc] sm:$0xf]
    %v480 = vld [vmem:[#allocation6 + $0x10] sm:$0xf]
    %v481 = vld [vmem:[#allocation6 + $0x14] sm:$0xf]
    %v482 = vld [vmem:[#allocation6 + $0x18] sm:$0xf]
    %v483 = vld [vmem:[#allocation6 + $0x1c] sm:$0xf]
    %v484 = vld [vmem:[#allocation6 + $0x20] sm:$0xf]
    %v485 = vld [vmem:[#allocation6 + $0x24] sm:$0xf]
    %v486 = vld [vmem:[#allocation6 + $0x28] sm:$0xf]
    %v487 = vld [vmem:[#allocation6 + $0x2c] sm:$0xf]
    %v488 = vld [vmem:[#allocation6 + $0x30] sm:$0xf]
    %v489 = vld [vmem:[#allocation6 + $0x34] sm:$0xf]
    %v490 = vld [vmem:[#allocation6 + $0x38] sm:$0xf]
    %v491 = vld [vmem:[#allocation6 + $0x3c] sm:$0xf]
    %v492 = vld [vmem:[#allocation6 + $0x40] sm:$0xf]
    %v493 = vld [vmem:[#allocation6 + $0x44] sm:$0xf]
    %v494 = vld [vmem:[#allocation6 + $0x48] sm:$0xf]
    %v495 = vld [vmem:[#allocation6 + $0x4c] sm:$0xf]
    %v496 = vld [vmem:[#allocation6 + $0x50] sm:$0xf]
    %v497 = vld [vmem:[#allocation6 + $0x54] sm:$0xf]
    %v498 = vld [vmem:[#allocation6 + $0x58] sm:$0xf]
    %v499 = vld [vmem:[#allocation6 + $0x5c] sm:$0xf]
    %v500 = vld [vmem:[#allocation6 + $0x60] sm:$0xf]
    %v501 = vld [vmem:[#allocation6 + $0x64] sm:$0xf]
    %v502 = vld [vmem:[#allocation6 + $0x68] sm:$0xf]
    %v503 = vld [vmem:[#allocation6 + $0x6c] sm:$0xf]
    %v504 = vld [vmem:[#allocation6 + $0x70] sm:$0xf]
    %v505 = vld [vmem:[#allocation6 + $0x74] sm:$0xf]
    %v506 = vld [vmem:[#allocation6 + $0x78] sm:$0xf]
    %v507 = vld [vmem:[#allocation6 + $0x7c] sm:$0xf]
    %v508 = vld [vmem:[%s6] sm:$0x1]
    %v510 = vperm.slane %v508, 0
    %v544 = vunpack.c.l.b16 %v476
    %v545 = vunpack.c.l.b16 %v477
    %v546 = vunpack.c.l.b16 %v478
    %v547 = vunpack.c.l.b16 %v479
    %v548 = vunpack.c.l.b16 %v480
    %v549 = vunpack.c.l.b16 %v481
    %v550 = vunpack.c.l.b16 %v482
    %v551 = vunpack.c.l.b16 %v483
    %v552 = vunpack.c.l.b16 %v484
    %v553 = vunpack.c.l.b16 %v485
    %v554 = vunpack.c.l.b16 %v486
    %v555 = vunpack.c.l.b16 %v487
    %v556 = vunpack.c.l.b16 %v488
    %v557 = vunpack.c.l.b16 %v489
    %v558 = vunpack.c.l.b16 %v490
    %v559 = vunpack.c.l.b16 %v491
    %v560 = vunpack.c.l.b16 %v492
    %v561 = vunpack.c.l.b16 %v493
    %v562 = vunpack.c.l.b16 %v494
    %v563 = vunpack.c.l.b16 %v495
    %v564 = vunpack.c.l.b16 %v496
    %v565 = vunpack.c.l.b16 %v497
    %v566 = vunpack.c.l.b16 %v498
    %v567 = vunpack.c.l.b16 %v499
    %v568 = vunpack.c.l.b16 %v500
    %v569 = vunpack.c.l.b16 %v501
    %v570 = vunpack.c.l.b16 %v502
    %v571 = vunpack.c.l.b16 %v503
    %v572 = vunpack.c.l.b16 %v504
    %v573 = vunpack.c.l.b16 %v505
    %v574 = vunpack.c.l.b16 %v506
    %v575 = vunpack.c.l.b16 %v507
    %v576 = vpack.c.b16 %v545, %v544
    %v577 = vpack.c.b16 %v547, %v546
    %v578 = vpack.c.b16 %v549, %v548
    %v579 = vpack.c.b16 %v551, %v550
    %v580 = vpack.c.b16 %v553, %v552
    %v581 = vpack.c.b16 %v555, %v554
    %v582 = vpack.c.b16 %v557, %v556
    %v583 = vpack.c.b16 %v559, %v558
    %v584 = vpack.c.b16 %v561, %v560
    %v585 = vpack.c.b16 %v563, %v562
    %v586 = vpack.c.b16 %v565, %v564
    %v587 = vpack.c.b16 %v567, %v566
    %v588 = vpack.c.b16 %v569, %v568
    %v589 = vpack.c.b16 %v571, %v570
    %v590 = vpack.c.b16 %v573, %v572
    %v591 = vpack.c.b16 %v575, %v574
    %608 = vmatpush.bf16.msra.mxu0 %v583
    %609 = vmatpush.bf16.msra.mxu0 %v582
    %610 = vmatpush.bf16.msra.mxu0 %v581
    %611 = vmatpush.bf16.msra.mxu0 %v580
    %612 = vmatpush.bf16.msra.mxu0 %v579
    %613 = vmatpush.bf16.msra.mxu0 %v578
    %614 = vmatpush.bf16.msra.mxu0 %v577
    %615 = vmatpush.bf16.msra.mxu0 %v576
    %616 = vmatmul.bf16.gmra.mxu0 %v474
    %v617 = vpop.f32.mrf.mxu0
    %v618 = vadd.f32 %v510, %v617
    %v619 = vpop.f32.mrf.mxu0
    %v620 = vadd.f32 %v510, %v619
    %621 = vdwg.mxu0
    %622 = vmatpush.bf16.msra.mxu0 %v591
    %623 = vmatpush.bf16.msra.mxu0 %v590
    %624 = vmatpush.bf16.msra.mxu0 %v589
    %625 = vmatpush.bf16.msra.mxu0 %v588
    %626 = vmatpush.bf16.msra.mxu0 %v587
    %627 = vmatpush.bf16.msra.mxu0 %v586
    %628 = vmatpush.bf16.msra.mxu0 %v585
    %629 = vmatpush.bf16.msra.mxu0 %v584
    %630 = vmatmul.bf16.gmra.mxu0 %v475
    %v631 = vpop.f32.mrf.mxu0
    %v632 = vadd.f32 %v618, %v631
    %v633 = vpop.f32.mrf.mxu0
    %v634 = vadd.f32 %v620, %v633
    %635 = vdwg.mxu0
    %v636 = vmul.f32 %v632, 0.5
    %v637 = vmul.f32 %v634, 0.5
    %v638 = vtanh.pop %v636
    %v639 = vtanh.pop %v637
    %v640 = vadd.f32 %v638, 1.0
    %v641 = vadd.f32 %v639, 1.0
    %v642 = vmul.f32 %v640, 0.5
    %v643 = vmul.f32 %v641, 0.5
    %v644 = vpack.c.bf16 %v642, %v642
    %v645 = vpack.c.bf16 %v643, %v643
    %646 = vst [vmem:[%s7] sm:$0xf] %v644
    %647 = vst [vmem:[%s7 + $0x4] sm:$0xf] %v645
    // Predicated region
    $region42: #{find_correct_piece_forward.1} parent=1 // pred_check
      _
    $region43: #{find_correct_piece_forward.1} parent=1 // pred_check_branch
      %649 = sbr.rel (0) target = $region45
    $region44: #{find_correct_piece_forward.1} parent=1 // pred_region
      _
    $region45: #{find_correct_piece_forward.1} parent=1 // pred_fallthru
      _
    // Predicated region
    $region46: #{find_correct_piece_forward.1} parent=1 // pred_check
      _
    $region47: #{find_correct_piece_forward.1} parent=1 // pred_check_branch
      %651 = sbr.rel (0) target = $region49
    $region48: #{find_correct_piece_forward.1} parent=1 // pred_region
      _
    $region49: #{find_correct_piece_forward.1} parent=1 // pred_fallthru
      _
    %652 = vsyncpa [#allocation3], 1
    %653 = vsyncpa [#allocation5], 1

</llo_original>
